<compile_context>
chip_gen: v7x
topology: tpu7x:2x2x1
jax: 0.10.0
libtpu: 0.0.40
codegen_flags: <defaults>
</compile_context>

<pallas_src>
import math

import jax
import jax.numpy as jnp
from jax.experimental import pallas as pl
from jax.experimental.pallas import tpu as pltpu


# --------------------------------------------------------------------------- #
# Kernel
# --------------------------------------------------------------------------- #
def _affine_kernel(x_ref, w_ref, b_ref, o_ref):
    """y = x @ W + b  for one batch tile.  All-f32 compute.

    K (= w_ref.shape[0]) is static:
      * K <= 8  : VPU broadcast FMAs (avoids a padding-dominated MXU matmul).
      * K >  8  : MXU matmul with f32 accumulation (packed lane-dense path).
    """
    x = x_ref[...]
    w = w_ref[...]
    b = b_ref[...]
    k = w.shape[0]
    if k <= 8:
        acc = b  # (1, N) -> broadcasts up to (tb, N) on first add
        for kk in range(k):
            acc = acc + x[:, kk:kk + 1] * w[kk:kk + 1, :]
    else:
        acc = jnp.dot(x, w, preferred_element_type=jnp.float32) + b
    o_ref[...] = acc.astype(o_ref.dtype)


def _affine_pallas(x2d, w, b, *, row_tile, out_dtype):
    """Tiled y = x2d @ w + b over the row (batch) axis."""
    rows, k = x2d.shape
    n = w.shape[1]

    # Row tile: biggest tile that is a multiple of 8 sublanes, or the full
    # extent when the array is smaller than one tile.
    if row_tile >= rows:
        tb = rows
    else:
        tb = max(8, (row_tile // 8) * 8)
    grid = (pl.cdiv(rows, tb),)

    return pl.pallas_call(
        _affine_kernel,
        out_shape=jax.ShapeDtypeStruct((rows, n), out_dtype),
        grid_spec=pltpu.PrefetchScalarGridSpec(
            num_scalar_prefetch=0,
            grid=grid,
            in_specs=[
                # x tile streams over the batch axis.
                pl.BlockSpec((tb, k), lambda i: (i, 0)),
                # Weight + bias: constant block index -> stay VMEM-resident
                # across all grid steps (no re-DMA).
                pl.BlockSpec((k, n), lambda i: (0, 0)),
                pl.BlockSpec((1, n), lambda i: (0, 0)),
            ],
            out_specs=pl.BlockSpec((tb, n), lambda i: (i, 0)),
        ),
        compiler_params=pltpu.CompilerParams(
            # Batch axis is independent work (megacore sharding on v7x,
            # harmless on 1-TC v5e/v6e).
            dimension_semantics=("parallel",),
        ),
    )(x2d, w, b)


# --------------------------------------------------------------------------- #
# Parameter preparation (parameter-update time, NOT per forward call)
# --------------------------------------------------------------------------- #
def _choose_pack(in_features, out_features, max_pack=128):
    """Smallest G making both G*in and G*out multiples of 128 lanes."""
    if in_features % 128 == 0 and out_features % 128 == 0:
        return 1  # already lane-dense
    g_in = 128 // math.gcd(128, in_features)
    g_out = 128 // math.gcd(128, out_features)
    g = (g_in * g_out) // math.gcd(g_in, g_out)  # lcm
    return g if g <= max_pack else 1


def prepare_params(params, *, pack=None):
    """Collapse the activation-free linear stack and build the packed weights.

    In a real setup this runs once per parameter update and the result is
    cached; only the Pallas kernel runs per inference call.
    """
    w1, b1 = params["w1"], params["b1"]
    w2, b2 = params["w2"], params["b2"]
    w3, b3 = params["w3"], params["b3"]

    w_eff = w1 @ w2 @ w3                    # (in_features, out_features)
    b_eff = (b1 @ w2 + b2) @ w3 + b3        # (1, out_features)

    in_f, out_f = w_eff.shape
    if pack is None:
        pack = _choose_pack(in_f, out_f)

    prepared = dict(w_eff=w_eff, b_eff=b_eff, pack=pack)
    if pack > 1:
        # Block-diagonal weight: maps the sample-interleaved packed input row
        # [s0f0, s0f1, s1f0, ...] to the packed output row [s0y0..s0y3, s1y0, ...].
        prepared["w_packed"] = jnp.kron(jnp.eye(pack, dtype=w_eff.dtype), w_eff)
        prepared["b_packed"] = jnp.tile(b_eff, (1, pack))
    return prepared


# --------------------------------------------------------------------------- #
# Forward
# --------------------------------------------------------------------------- #
def blob_model_forward(x, prepared, *, batch_tile=16384, out_dtype=jnp.float32):
    """Forward pass of BlobModel.

    x: (batch, input_features) float32
    prepared: output of prepare_params(params)
    out_dtype: jnp.float32 for exact module parity, jnp.bfloat16 to halve the
               dominant output HBM write traffic (fine for class logits).
    """
    w_eff, b_eff = prepared["w_eff"], prepared["b_eff"]
    g = prepared["pack"]
    batch, in_f = x.shape
    out_f = w_eff.shape[1]

    if g > 1 and batch % g == 0:
        # Lane-dense packed path (main path for training/eval batches).
        rows = batch // g
        xp = x.reshape(rows, g * in_f)                      # free row-major reshape
        yp = _affine_pallas(
            xp, prepared["w_packed"], prepared["b_packed"],
            row_tile=max(batch_tile // g, 8), out_dtype=out_dtype)
        return yp.reshape(batch, out_f)                     # free row-major reshape

    # Fallback: tiny or non-divisible batches.  Lane-padded VMEM layout costs
    # ~1 KiB/row, so cap the row tile to stay well inside the scoped VMEM limit.
    return _affine_pallas(x, w_eff, b_eff,
                          row_tile=min(batch_tile, 4096), out_dtype=out_dtype)


# --------------------------------------------------------------------------- #
# Parameter init (mirrors torch nn.Linear's default uniform range)
# --------------------------------------------------------------------------- #
def init_params(key, input_features, output_features, hidden_units=8):
    ks = jax.random.split(key, 6)

    def linear(kw, kb, fan_in, fan_out):
        bound = 1.0 / math.sqrt(fan_in)
        # stored as (in, out) so the forward does x @ W directly
        w = jax.random.uniform(kw, (fan_in, fan_out), jnp.float32, -bound, bound)
        b = jax.random.uniform(kb, (1, fan_out), jnp.float32, -bound, bound)
        return w, b

    w1, b1 = linear(ks[0], ks[1], input_features, hidden_units)
    w2, b2 = linear(ks[2], ks[3], hidden_units, hidden_units)
    w3, b3 = linear(ks[4], ks[5], hidden_units, output_features)
    return dict(w1=w1, b1=b1, w2=w2, b2=b2, w3=w3, b3=b3)


if __name__ == "__main__":
    key = jax.random.PRNGKey(0)
    k_x, k_p, k_x2 = jax.random.split(key, 3)

    # Shapes consistent with the module: 2 input features (blob x/y),
    # 8 hidden units (default), 4 output classes.
    input_features, output_features, hidden_units = 2, 4, 8

    params = init_params(k_p, input_features, output_features, hidden_units)
    prepared = prepare_params(params)  # done once per parameter update

    fwd = jax.jit(lambda xx: blob_model_forward(xx, prepared))

    def ref_forward(xx):  # plain-JAX f32 reference of the uncollapsed forward
        return (((xx @ params["w1"] + params["b1"]) @ params["w2"] + params["b2"])
                @ params["w3"] + params["b3"])

    # 1) Small batch -> unpacked VPU-FMA path.
    x_small = jax.random.normal(k_x, (8, input_features), jnp.float32)
    out_small = jax.block_until_ready(fwd(x_small))
    assert out_small.shape == (8, output_features)
    assert jnp.allclose(out_small, ref_forward(x_small), atol=2e-2, rtol=2e-2), \
        float(jnp.max(jnp.abs(out_small - ref_forward(x_small))))

    # 2) Larger batch -> lane-dense packed MXU path (pack factor 64).
    x_big = jax.random.normal(k_x2, (4096, input_features), jnp.float32)
    out_big = jax.block_until_ready(fwd(x_big))
    assert out_big.shape == (4096, output_features)
    assert jnp.allclose(out_big, ref_forward(x_big), atol=2e-2, rtol=2e-2), \
        float(jnp.max(jnp.abs(out_big - ref_forward(x_big))))

    print("KERNEL_OK")
</pallas_src>

<mosaic_0001>
module attributes {stable_mosaic.version = 11 : i64} {
  func.func @_affine_kernel(%arg0: i32, %arg1: memref<8x2xf32, #tpu.memory_space<vmem>>, %arg2: memref<2x4xf32, #tpu.memory_space<vmem>>, %arg3: memref<1x4xf32, #tpu.memory_space<vmem>>, %arg4: memref<8x4xf32, #tpu.memory_space<vmem>>) attributes {dimension_semantics = [#tpu.dimension_semantics<parallel>], iteration_bounds = array<i64: 1>, scalar_prefetch = 0 : i64, scratch_operands = 0 : i64, tpu.core_type = #tpu.core_type<tc>, window_params = [{transform_indices = @transform_0, window_bounds = array<i64: 8, 2>}, {pipeline_mode = #tpu.pipeline_mode<synchronous>, transform_indices = @transform_1, window_bounds = array<i64: 2, 4>}, {pipeline_mode = #tpu.pipeline_mode<synchronous>, transform_indices = @transform_2, window_bounds = array<i64: 1, 4>}, {transform_indices = @transform_3, window_bounds = array<i64: 8, 4>}]} {
    %c0 = arith.constant 0 : index
    %c0_0 = arith.constant 0 : index
    %0 = vector.load %arg1[%c0, %c0_0] : memref<8x2xf32, #tpu.memory_space<vmem>>, vector<8x2xf32>
    %c0_1 = arith.constant 0 : index
    %c0_2 = arith.constant 0 : index
    %1 = vector.load %arg2[%c0_1, %c0_2] : memref<2x4xf32, #tpu.memory_space<vmem>>, vector<2x4xf32>
    %c0_3 = arith.constant 0 : index
    %c0_4 = arith.constant 0 : index
    %2 = vector.load %arg3[%c0_3, %c0_4] : memref<1x4xf32, #tpu.memory_space<vmem>>, vector<1x4xf32>
    %3 = vector.extract_strided_slice %0 {offsets = [0, 0], sizes = [8, 1], strides = [1, 1]} : vector<8x2xf32> to vector<8x1xf32>
    %4 = vector.extract_strided_slice %1 {offsets = [0, 0], sizes = [1, 4], strides = [1, 1]} : vector<2x4xf32> to vector<1x4xf32>
    %5 = vector.broadcast %3 : vector<8x1xf32> to vector<8x4xf32>
    %6 = vector.broadcast %4 : vector<1x4xf32> to vector<8x4xf32>
    %7 = arith.mulf %5, %6 : vector<8x4xf32>
    %8 = vector.broadcast %2 : vector<1x4xf32> to vector<8x4xf32>
    %9 = arith.addf %8, %7 : vector<8x4xf32>
    %10 = vector.extract_strided_slice %0 {offsets = [0, 1], sizes = [8, 1], strides = [1, 1]} : vector<8x2xf32> to vector<8x1xf32>
    %11 = vector.extract_strided_slice %1 {offsets = [1, 0], sizes = [1, 4], strides = [1, 1]} : vector<2x4xf32> to vector<1x4xf32>
    %12 = vector.broadcast %10 : vector<8x1xf32> to vector<8x4xf32>
    %13 = vector.broadcast %11 : vector<1x4xf32> to vector<8x4xf32>
    %14 = arith.mulf %12, %13 : vector<8x4xf32>
    %15 = arith.addf %9, %14 : vector<8x4xf32>
    %c0_5 = arith.constant 0 : index
    %c0_6 = arith.constant 0 : index
    %16 = vector.load %arg4[%c0_5, %c0_6] : memref<8x4xf32, #tpu.memory_space<vmem>>, vector<8x4xf32>
    tpu.vector_store %arg4[%c0_5, %c0_6], %15 {strides = array<i32>} : memref<8x4xf32, #tpu.memory_space<vmem>>, vector<8x4xf32>,
    return
  }
  func.func @transform_0(%arg0: i32) -> (i32, i32) {
    %c0_i32 = arith.constant 0 : i32
    %c0_i32_0 = arith.constant 0 : i32
    return %arg0, %c0_i32 : i32, i32
  }
  func.func @transform_1(%arg0: i32) -> (i32, i32) {
    %c0_i32 = arith.constant 0 : i32
    %c0_i32_0 = arith.constant 0 : i32
    %c0_i32_1 = arith.constant 0 : i32
    return %c0_i32, %c0_i32_0 : i32, i32
  }
  func.func @transform_2(%arg0: i32) -> (i32, i32) {
    %c0_i32 = arith.constant 0 : i32
    %c0_i32_0 = arith.constant 0 : i32
    %c0_i32_1 = arith.constant 0 : i32
    return %c0_i32, %c0_i32_0 : i32, i32
  }
  func.func @transform_3(%arg0: i32) -> (i32, i32) {
    %c0_i32 = arith.constant 0 : i32
    %c0_i32_0 = arith.constant 0 : i32
    return %arg0, %c0_i32 : i32, i32
  }
}

</mosaic_0001>

<llo_original>
// kernel: _lambda_.1
$region0: #{_lambda_.1}
  #allocation0 [shape = 'u32[]', space=smem, size = 0x4, offset = 0x4, fixed_abs, tag = 'smem constant byte address 0x4 - core index']
  #allocation1 [shape = 'u32[144,128]{1,0:T(1,128)}', space=vmem, size = 0x12000, scoped, tag = 'internal scratch']
  %s0 = inlined_call_operand.vmem [shape: f32[8,2], index: 0, kind: input, shape index: {}]
  %s1 = inlined_call_operand.vmem [shape: f32[2,4], index: 1, kind: input, shape index: {}]
  %s2 = inlined_call_operand.vmem [shape: f32[1,4], index: 2, kind: input, shape index: {}]
  %s3 = inlined_call_operand.vmem [shape: f32[8,4], index: 3, kind: output, shape index: {}]
  %s4 = sld [smem:[#allocation0]]
  $region22: #{_lambda_.1} parent=0
    _
  %s6 = ssub.s32 1, %s4
  %s7 = scalar_select 0, %s6, %s4
  // Predicated region
  $region2: #{_lambda_.1} parent=0 // pred_check
    _
  $region3: #{_lambda_.1} parent=0 // pred_check_branch
    %9 = sbr.rel (0) target = $region5
  $region4: #{_lambda_.1} parent=0 // pred_region
    _
  $region5: #{_lambda_.1} parent=0 // pred_fallthru
    _
  // Predicated region
  $region6: #{_lambda_.1} parent=0 // pred_check
    _
  $region7: #{_lambda_.1} parent=0 // pred_check_branch
    %11 = sbr.rel (0) target = $region9
  $region8: #{_lambda_.1} parent=0 // pred_region
    _
  $region9: #{_lambda_.1} parent=0 // pred_fallthru
    _
  // Predicated region
  $region10: #{_lambda_.1} parent=0 // pred_check
    _
  $region11: #{_lambda_.1} parent=0 // pred_check_branch
    %13 = sbr.rel (0) target = $region13
  $region12: #{_lambda_.1} parent=0 // pred_region
    _
  $region13: #{_lambda_.1} parent=0 // pred_fallthru
    _
  %v14 = vld [vmem:[%s0] sm:$0xff]
  %v15 = vld [vmem:[%s1] sm:$0x3]
  %v16 = vld [vmem:[%s2] sm:$0x1]
  %18 = vset.pattern.permute.xlu0 0
  %19 = vperm.xlu0 %18, %v14
  %v20 = vpop.permute.xlu0 %19
  %v22 = vlaneseq
  %v23 = vshrl.u32 %v22, 7
  %v24 = vsub.s32 0, %v23
  %v25 = vrot.slane %v15, %v24
  %v26 = vmul.f32 %v20, %v25
  %v28 = vlaneseq
  %v29 = vshrl.u32 %v28, 7
  %v30 = vsub.s32 0, %v29
  %v31 = vrot.slane %v16, %v30
  %v33 = vadd.f32 %v31, %v26
  %34 = vset.pattern.permute.xlu0 1
  %35 = vperm.xlu0 %34, %v14
  %v36 = vpop.permute.xlu0 %35
  %v38 = vlaneseq
  %v39 = vshrl.u32 %v38, 7
  %v40 = vsub.s32 1, %v39
  %v41 = vrot.slane %v15, %v40
  %v42 = vmul.f32 %v36, %v41
  %v43 = vadd.f32 %v33, %v42
  %vm44 = vcmask 31744
  %45 = vst.msk [vmem:[%s3] sm:$0xff] %vm44, %v43
  // Predicated region
  $region14: #{_lambda_.1} parent=0 // pred_check
    _
  $region15: #{_lambda_.1} parent=0 // pred_check_branch
    %47 = sbr.rel (0) target = $region17
  $region16: #{_lambda_.1} parent=0 // pred_region
    _
  $region17: #{_lambda_.1} parent=0 // pred_fallthru
    _
  // Predicated region
  $region18: #{_lambda_.1} parent=0 // pred_check
    _
  $region19: #{_lambda_.1} parent=0 // pred_check_branch
    %49 = sbr.rel (0) target = $region21
  $region20: #{_lambda_.1} parent=0 // pred_region
    _
  $region21: #{_lambda_.1} parent=0 // pred_fallthru
    _

</llo_original>
